<compile_context>
chip_gen: v7x
topology: tpu7x:2x2x1
jax: 0.10.0
libtpu: 0.0.40
codegen_flags: <defaults>
</compile_context>

<pallas_src>
import functools

import jax
import jax.numpy as jnp
import numpy as np
from jax.experimental import pallas as pl
from jax.experimental.pallas import tpu as pltpu

_LANE = 128
_MAX_TN = 131072  # absolute cap on the lane-tile size


def _pop_predictor_kernel(stage_ref, item_ref, out_ref, *, a, inv_a):
    item = item_ref[...]            # [P, TN] float32, P = period + 2
    stage = stage_ref[...]          # [1, TN] int32
    p, tn = item.shape

    c0 = item[0:1, :]               # [1, TN]
    c1 = item[1:2, :]
    x1 = c0 - (c1 - c0) * inv_a
    x0 = x1 - (c0 - x1) * inv_a

    one_plus_a = jnp.float32(1.0 + a)
    neg_a = jnp.float32(-a)

    # Conceptual new_items (rows) = [x0 | x1 | item] -> [P+2, TN].
    # out[n] = (1+a) * new_items[stage[n]+1, n] - a * new_items[stage[n], n]
    # Implemented as ONE weighted sublane reduction over `item` plus two
    # lane-wise edge terms for the synthetic x0/x1 rows.
    row = jax.lax.broadcasted_iota(jnp.int32, (p, tn), 0)   # sublane index
    w_item = (jnp.where(row == (stage - 1), one_plus_a, jnp.float32(0.0))
              + jnp.where(row == (stage - 2), neg_a, jnp.float32(0.0)))
    item_sum = jnp.sum(w_item * item, axis=0, keepdims=True)  # [1, TN]

    fdt = item.dtype
    w0 = (one_plus_a * (stage == -1).astype(fdt)
          + neg_a * (stage == 0).astype(fdt))
    w1 = (one_plus_a * (stage == 0).astype(fdt)
          + neg_a * (stage == 1).astype(fdt))

    out_ref[...] = item_sum + w0 * x0 + w1 * x1


def _round_up(x, m):
    return (x + m - 1) // m * m


def _vmem_budget_bytes():
    """Generation-aware budget for the double-buffered pipeline working set."""
    kind = ""
    try:
        kind = jax.devices()[0].device_kind.lower()
    except Exception:  # pragma: no cover - defensive only
        pass
    if "v7" in kind:
        # 64 MiB physical VMEM per TC: keep the pipeline well under half.
        return 24 << 20
    if "v5 lite" in kind or "v5e" in kind or "v5lite" in kind:
        # 128 MiB physical; ~820 GB/s HBM already hides per-step overhead at
        # moderate tiles, no need to be aggressive.
        return 24 << 20
    # v6e / v5p / v4 / unknown: 128 MiB physical VMEM -> push tiles hard.
    return 48 << 20


def _choose_tile(n, budget_bytes):
    """Pick (tn, grid, n_pad).  Per-tile DMA footprint ~= 256*tn bytes."""
    n128 = _round_up(max(n, 1), _LANE)
    max_tn = max(_LANE, min(_MAX_TN, (budget_bytes // 256) // _LANE * _LANE))
    if n128 > max_tn:
        tn = max_tn
    elif n128 >= 2 * _LANE:
        # Fits in one tile: still split in two so the parallel N axis can use
        # both v7x TensorCores and the DMA pipeline has something to overlap.
        tn = _round_up(pl.cdiv(n128, 2), _LANE)
    else:
        tn = n128
    grid = pl.cdiv(n128, tn)
    if grid > 2 and grid % 2 == 1:
        # Prefer an even step count so the two-TC split is balanced.
        tn = _round_up(pl.cdiv(n128, grid + 1), _LANE)
        grid = pl.cdiv(n128, tn)
    n_pad = grid * tn
    return tn, grid, n_pad


def pop_predictor(stage, item, *, a):
    """stage: [N] int, item: [period+2, N] float -> [N] float32."""
    item = jnp.asarray(item, jnp.float32)                  # [P, N] (no transpose)
    p, n = item.shape
    stage2d = jnp.asarray(stage, jnp.int32).reshape(1, n)  # [1, N] lane-dense

    budget = _vmem_budget_bytes()
    tn, grid_n, n_pad = _choose_tile(n, budget)

    if n_pad != n:
        # Pad with zero item columns and a sentinel stage whose fused weights
        # are all zero -> padded lanes produce exactly 0 and are sliced off.
        item = jnp.pad(item, ((0, 0), (0, n_pad - n)))
        stage2d = jnp.pad(stage2d, ((0, 0), (0, n_pad - n)),
                          constant_values=-100)

    cost = pl.CostEstimate(
        flops=int(n_pad * (5 * p + 20)),
        transcendentals=0,
        bytes_accessed=int(4 * n_pad * (p + 2)),
    )

    # Scoped-VMEM limit covering the chosen double-buffered working set
    # (important on v5e whose default scoped limit is only 16 MiB).
    vmem_limit = int(min(budget + (8 << 20), 56 << 20))

    out = pl.pallas_call(
        functools.partial(_pop_predictor_kernel, a=float(a),
                          inv_a=float(1.0 / a)),
        out_shape=jax.ShapeDtypeStruct((1, n_pad), jnp.float32),
        grid=(grid_n,),
        in_specs=[
            pl.BlockSpec((1, tn), lambda i: (0, i)),   # stage  [1, TN]
            pl.BlockSpec((p, tn), lambda i: (0, i)),   # item   [P, TN]
        ],
        out_specs=pl.BlockSpec((1, tn), lambda i: (0, i)),
        compiler_params=pltpu.CompilerParams(
            dimension_semantics=("parallel",),
            vmem_limit_bytes=vmem_limit),
        cost_estimate=cost,
    )(stage2d, item)
    return out[0, :n]


def pop_predictor_ref(stage, item, *, a, period):
    """Pure-JAX mirror of the PyTorch forward (verification only)."""
    item_T = item.T                                        # [N, P]
    c0 = item_T[:, 0]
    c1 = item_T[:, 1]
    x1 = c0 - (c1 - c0) / a
    x0 = x1 - (c0 - x1) / a
    new_items = jnp.concatenate(
        [x0.reshape(1, -1), x1.reshape(1, -1), item], axis=0).T  # [N, P+2]
    new_stages = stage + 2
    nc = period + 4
    oh1 = jax.nn.one_hot(new_stages - 1, nc, dtype=new_items.dtype)
    oh2 = jax.nn.one_hot(new_stages - 2, nc, dtype=new_items.dtype)
    s1 = (new_items * oh1).sum(1)
    s2 = (new_items * oh2).sum(1)
    return a * (s1 - s2) + s1


if __name__ == "__main__":
    # Deterministic "config" (PopPredictor.__init__ only reads two scalars).
    A = 2.0          # world.config['predict']
    PERIOD = 8       # world.config['period']

    key = jax.random.PRNGKey(0)
    keys = jax.random.split(key, 6)

    def check(n, k_item, k_stage):
        item = jax.random.normal(k_item, (PERIOD + 2, n), dtype=jnp.float32)
        stage = jax.random.randint(k_stage, (n,), 0, PERIOD, dtype=jnp.int32)
        out = jax.block_until_ready(pop_predictor(stage, item, a=A))
        ref = pop_predictor_ref(stage, item, a=A, period=PERIOD)
        np.testing.assert_allclose(np.asarray(out), np.asarray(ref),
                                   rtol=1e-5, atol=1e-5)

    # Tiny shape (pads 16 -> 128 lanes, single grid step).
    check(16, keys[0], keys[1])
    # Lane-aligned shape (split into two tiles -> 2-step parallel grid).
    check(256, keys[2], keys[3])
    # Non-128-divisible shape (exercises sentinel padding + multi-step grid).
    check(1000, keys[4], keys[5])

    print("KERNEL_OK")
</pallas_src>

<mosaic_0001>
module attributes {stable_mosaic.version = 11 : i64} {
  func.func @_pop_predictor_kernel(%arg0: i32, %arg1: memref<1x128xi32, #tpu.memory_space<vmem>>, %arg2: memref<10x128xf32, #tpu.memory_space<vmem>>, %arg3: memref<1x128xf32, #tpu.memory_space<vmem>>) attributes {dimension_semantics = [#tpu.dimension_semantics<parallel>], iteration_bounds = array<i64: 1>, scalar_prefetch = 0 : i64, scratch_operands = 0 : i64, tpu.core_type = #tpu.core_type<tc>, window_params = [{transform_indices = @transform_0, window_bounds = array<i64: 1, 128>}, {transform_indices = @transform_1, window_bounds = array<i64: 10, 128>}, {transform_indices = @transform_2, window_bounds = array<i64: 1, 128>}]} {
    %c0 = arith.constant 0 : index
    %c0_0 = arith.constant 0 : index
    %0 = vector.load %arg2[%c0, %c0_0] : memref<10x128xf32, #tpu.memory_space<vmem>>, vector<10x128xf32>
    %c0_1 = arith.constant 0 : index
    %c0_2 = arith.constant 0 : index
    %1 = vector.load %arg1[%c0_1, %c0_2] : memref<1x128xi32, #tpu.memory_space<vmem>>, vector<1x128xi32>
    %2 = vector.extract_strided_slice %0 {offsets = [0, 0], sizes = [1, 128], strides = [1, 1]} : vector<10x128xf32> to vector<1x128xf32>
    %3 = vector.extract_strided_slice %0 {offsets = [1, 0], sizes = [1, 128], strides = [1, 1]} : vector<10x128xf32> to vector<1x128xf32>
    %4 = arith.subf %3, %2 : vector<1x128xf32>
    %cst = arith.constant 5.000000e-01 : f32
    %5 = vector.broadcast %cst : f32 to vector<1x128xf32>
    %6 = arith.mulf %4, %5 : vector<1x128xf32>
    %7 = arith.subf %2, %6 : vector<1x128xf32>
    %8 = arith.subf %2, %7 : vector<1x128xf32>
    %cst_3 = arith.constant 5.000000e-01 : f32
    %9 = vector.broadcast %cst_3 : f32 to vector<1x128xf32>
    %10 = arith.mulf %8, %9 : vector<1x128xf32>
    %11 = arith.subf %7, %10 : vector<1x128xf32>
    %12 = tpu.iota {dimensions = array<i32: 0>} : vector<10x128xi32>
    %c1_i32 = arith.constant 1 : i32
    %13 = vector.broadcast %c1_i32 : i32 to vector<1x128xi32>
    %14 = arith.subi %1, %13 : vector<1x128xi32>
    %15 = vector.broadcast %14 : vector<1x128xi32> to vector<10x128xi32>
    %16 = arith.cmpi eq, %12, %15 : vector<10x128xi32>
    %cst_4 = arith.constant 3.000000e+00 : f32
    %cst_5 = arith.constant 0.000000e+00 : f32
    %17 = vector.broadcast %cst_4 : f32 to vector<10x128xf32>
    %18 = vector.broadcast %cst_5 : f32 to vector<10x128xf32>
    %19 = arith.select %16, %17, %18 : vector<10x128xi1>, vector<10x128xf32>
    %c2_i32 = arith.constant 2 : i32
    %20 = vector.broadcast %c2_i32 : i32 to vector<1x128xi32>
    %21 = arith.subi %1, %20 : vector<1x128xi32>
    %22 = vector.broadcast %21 : vector<1x128xi32> to vector<10x128xi32>
    %23 = arith.cmpi eq, %12, %22 : vector<10x128xi32>
    %cst_6 = arith.constant -2.000000e+00 : f32
    %cst_7 = arith.constant 0.000000e+00 : f32
    %24 = vector.broadcast %cst_6 : f32 to vector<10x128xf32>
    %25 = vector.broadcast %cst_7 : f32 to vector<10x128xf32>
    %26 = arith.select %23, %24, %25 : vector<10x128xi1>, vector<10x128xf32>
    %27 = arith.addf %19, %26 : vector<10x128xf32>
    %28 = arith.mulf %27, %0 : vector<10x128xf32>
    %cst_8 = arith.constant dense<0.000000e+00> : vector<128xf32>
    %29 = vector.multi_reduction <add>, %28, %cst_8 [0] : vector<10x128xf32> to vector<128xf32>
    %30 = vector.shape_cast %29 : vector<128xf32> to vector<1x128xf32>
    %c-1_i32 = arith.constant -1 : i32
    %31 = vector.broadcast %c-1_i32 : i32 to vector<1x128xi32>
    %32 = arith.cmpi eq, %1, %31 : vector<1x128xi32>
    %33 = arith.extui %32 : vector<1x128xi1> to vector<1x128xi32>
    %34 = arith.sitofp %33 : vector<1x128xi32> to vector<1x128xf32>
    %cst_9 = arith.constant 3.000000e+00 : f32
    %35 = vector.broadcast %cst_9 : f32 to vector<1x128xf32>
    %36 = arith.mulf %35, %34 : vector<1x128xf32>
    %c0_i32 = arith.constant 0 : i32
    %37 = vector.broadcast %c0_i32 : i32 to vector<1x128xi32>
    %38 = arith.cmpi eq, %1, %37 : vector<1x128xi32>
    %39 = arith.extui %38 : vector<1x128xi1> to vector<1x128xi32>
    %40 = arith.sitofp %39 : vector<1x128xi32> to vector<1x128xf32>
    %cst_10 = arith.constant -2.000000e+00 : f32
    %41 = vector.broadcast %cst_10 : f32 to vector<1x128xf32>
    %42 = arith.mulf %41, %40 : vector<1x128xf32>
    %43 = arith.addf %36, %42 : vector<1x128xf32>
    %c0_i32_11 = arith.constant 0 : i32
    %44 = vector.broadcast %c0_i32_11 : i32 to vector<1x128xi32>
    %45 = arith.cmpi eq, %1, %44 : vector<1x128xi32>
    %46 = arith.extui %45 : vector<1x128xi1> to vector<1x128xi32>
    %47 = arith.sitofp %46 : vector<1x128xi32> to vector<1x128xf32>
    %cst_12 = arith.constant 3.000000e+00 : f32
    %48 = vector.broadcast %cst_12 : f32 to vector<1x128xf32>
    %49 = arith.mulf %48, %47 : vector<1x128xf32>
    %c1_i32_13 = arith.constant 1 : i32
    %50 = vector.broadcast %c1_i32_13 : i32 to vector<1x128xi32>
    %51 = arith.cmpi eq, %1, %50 : vector<1x128xi32>
    %52 = arith.extui %51 : vector<1x128xi1> to vector<1x128xi32>
    %53 = arith.sitofp %52 : vector<1x128xi32> to vector<1x128xf32>
    %cst_14 = arith.constant -2.000000e+00 : f32
    %54 = vector.broadcast %cst_14 : f32 to vector<1x128xf32>
    %55 = arith.mulf %54, %53 : vector<1x128xf32>
    %56 = arith.addf %49, %55 : vector<1x128xf32>
    %57 = arith.mulf %43, %11 : vector<1x128xf32>
    %58 = arith.addf %30, %57 : vector<1x128xf32>
    %59 = arith.mulf %56, %7 : vector<1x128xf32>
    %60 = arith.addf %58, %59 : vector<1x128xf32>
    %c0_15 = arith.constant 0 : index
    %c0_16 = arith.constant 0 : index
    %61 = vector.load %arg3[%c0_15, %c0_16] : memref<1x128xf32, #tpu.memory_space<vmem>>, vector<1x128xf32>
    tpu.vector_store %arg3[%c0_15, %c0_16], %60 {strides = array<i32>} : memref<1x128xf32, #tpu.memory_space<vmem>>, vector<1x128xf32>,
    return
  }
  func.func @transform_0(%arg0: i32) -> (i32, i32) {
    %c0_i32 = arith.constant 0 : i32
    %c0_i32_0 = arith.constant 0 : i32
    return %c0_i32, %arg0 : i32, i32
  }
  func.func @transform_1(%arg0: i32) -> (i32, i32) {
    %c0_i32 = arith.constant 0 : i32
    %c0_i32_0 = arith.constant 0 : i32
    return %c0_i32, %arg0 : i32, i32
  }
  func.func @transform_2(%arg0: i32) -> (i32, i32) {
    %c0_i32 = arith.constant 0 : i32
    %c0_i32_0 = arith.constant 0 : i32
    return %c0_i32, %arg0 : i32, i32
  }
}

</mosaic_0001>

<llo_original>
// kernel: tpu_custom_call.1
$region0: #{tpu_custom_call.1}
  #allocation0 [shape = 'u32[]', space=smem, size = 0x4, offset = 0x4, fixed_abs, tag = 'smem constant byte address 0x4 - core index']
  #allocation1 [shape = 'u32[144,128]{1,0:T(1,128)}', space=vmem, size = 0x12000, scoped, tag = 'internal scratch']
  %s0 = inlined_call_operand.hbm [shape: s32[1,128], index: 0, kind: input, shape index: {}]
  %s1 = inlined_call_operand.hbm [shape: f32[10,128], index: 1, kind: input, shape index: {}]
  %s2 = inlined_call_operand.hbm [shape: f32[1,128], index: 2, kind: output, shape index: {}]
  %s3 = sld [smem:[#allocation0]]
  $region26: #{tpu_custom_call.1} parent=0
    _
  %s5 = ssub.s32 1, %s3
  %s6 = scalar_select 0, %s5, %s3
  $region1: #{tpu_custom_call.1} parent=0
    #allocation2 [shape = 'u8[512]{0}', space=vmem, size = 0x400, scoped, tag = 'input window, operand 0, single buffered']
    #allocation3 [shape = 's32[1]{0}', space=sflag, size = 0x4, scoped, tag = 'scoped memory for tpu_custom_call.1']
    #allocation4 [shape = 's32[1]{0}', space=sflag, size = 0x4, scoped, tag = 'scoped memory for tpu_custom_call.1']
    #allocation5 [shape = 'u8[8192]{0}', space=vmem, size = 0x2000, scoped, tag = 'input window, operand 1, single buffered']
    #allocation6 [shape = 's32[1]{0}', space=sflag, size = 0x4, scoped, tag = 'scoped memory for tpu_custom_call.1']
    #allocation7 [shape = 'u8[512]{0}', space=vmem, size = 0x400, scoped, tag = 'output window, operand 0, single buffered']
    %7 = vsyncpa [#allocation3], 0
    %8 = vsyncpa [#allocation6], 0
    %9 = vsyncpa [#allocation4], 0
    // Predicated region
    $region2: #{tpu_custom_call.1} parent=1 // pred_check
      _
    $region3: #{tpu_custom_call.1} parent=1 // pred_check_branch
      %11 = sbr.rel (0) target = $region5
    $region4: #{tpu_custom_call.1} parent=1 // pred_region
      %s13 = ssub.s32 16, 16
      %14 = vsyncadd [#allocation3], %s13
      %s16 = sshll.u32 [#allocation2], 4
      %s17 = int_to_ptr.vmem [resolvable:$true] %s16
      %19 = dma.hbm_to_vmem [thread:$0]  %s0, 16, %s17, [#allocation3]
    $region5: #{tpu_custom_call.1} parent=1 // pred_fallthru
      _
    // Predicated region
    $region6: #{tpu_custom_call.1} parent=1 // pred_check
      _
    $region7: #{tpu_custom_call.1} parent=1 // pred_check_branch
      %21 = sbr.rel (0) target = $region9
    $region8: #{tpu_custom_call.1} parent=1 // pred_region
      %s23 = ssub.s32 256, 256
      %24 = vsyncadd [#allocation6], %s23
      %s25 = sshll.u32 [#allocation5], 4
      %s26 = int_to_ptr.vmem [resolvable:$true] %s25
      %31 = dma.hbm_to_vmem [thread:$0]  %s1, 256, %s26, [#allocation6], 128, 128, 8
    $region9: #{tpu_custom_call.1} parent=1 // pred_fallthru
      _
    // Predicated region
    $region10: #{tpu_custom_call.1} parent=1 // pred_check
      _
    $region11: #{tpu_custom_call.1} parent=1 // pred_check_branch
      %33 = sbr.rel (0) target = $region13
    $region12: #{tpu_custom_call.1} parent=1 // pred_region
      %34 = dma.done [#allocation3], 16
    $region13: #{tpu_custom_call.1} parent=1 // pred_fallthru
      _
    // Predicated region
    $region14: #{tpu_custom_call.1} parent=1 // pred_check
      _
    $region15: #{tpu_custom_call.1} parent=1 // pred_check_branch
      %36 = sbr.rel (0) target = $region17
    $region16: #{tpu_custom_call.1} parent=1 // pred_region
      %37 = dma.done [#allocation6], 256
    $region17: #{tpu_custom_call.1} parent=1 // pred_fallthru
      _
    %v38 = vld [vmem:[#allocation5] sm:$0xff]
    %v39 = vld [vmem:[#allocation5 + $0x8] sm:$0x3]
    %v40 = vld [vmem:[#allocation2] sm:$0x1]
    %v42 = vrot.slane %v38, 7
    %v44 = vsub.f32 %v38, %v42
    %v45 = vmul.f32 %v44, 0.5
    %v47 = vrot.slane %v45, 1
    %v49 = vsub.f32 %v38, %v47
    %v50 = vsub.f32 %v38, %v49
    %v51 = vmul.f32 %v50, 0.5
    %v52 = vsub.f32 %v49, %v51
    %v53 = vlaneseq
    %v54 = vshrl.u32 %v53, 7
    %v55 = vadd.s32 %v54, 8
    %v56 = vsub.s32 %v40, 1
    %v57 = vlaneseq
    %v58 = vshrl.u32 %v57, 7
    %v59 = vsub.s32 0, %v58
    %v60 = vrot.slane %v56, %v59
    %vm61 = vcmp.eq.s32.totalorder %v54, %v60
    %vm62 = vcmp.eq.s32.totalorder %v55, %v60
    %v63 = vsel %vm61, 3.0, 0.0
    %v64 = vsel %vm62, 3.0, 0.0
    %v65 = vsub.s32 %v40, 2
    %v66 = vlaneseq
    %v67 = vshrl.u32 %v66, 7
    %v68 = vsub.s32 0, %v67
    %v69 = vrot.slane %v65, %v68
    %vm70 = vcmp.eq.s32.totalorder %v54, %v69
    %vm71 = vcmp.eq.s32.totalorder %v55, %v69
    %v72 = vsel %vm70, -2.0, 0.0
    %v73 = vsel %vm71, -2.0, 0.0
    %v74 = vadd.f32 %v63, %v72
    %v75 = vadd.f32 %v64, %v73
    %v76 = vmul.f32 %v74, %v38
    %v77 = vmul.f32 %v75, %v39
    %vm78 = vcmask 1041408
    %v79 = vsel %vm78, %v77, 0.0
    %v80 = vadd.f32 %v76, %v79
    %v81 = vrot.slane %v80, 4
    %v82 = vadd.f32 %v80, %v81
    %v83 = vrot.slane %v82, 2
    %v84 = vadd.f32 %v82, %v83
    %v85 = vrot.slane %v84, 1
    %v86 = vadd.f32 %v84, %v85
    %vm87 = vcmp.eq.s32.totalorder %v40, 4294967295
    %v88 = vsel %vm87, 1, 0
    %v89 = vcvt.s32.f32 %v88
    %v90 = vmul.f32 %v89, 3.0
    %vm91 = vcmp.eq.s32.totalorder %v40, 0
    %v92 = vsel %vm91, 1, 0
    %v93 = vcvt.s32.f32 %v92
    %v94 = vmul.f32 %v93, -2.0
    %v95 = vadd.f32 %v90, %v94
    %v96 = vmul.f32 %v93, 3.0
    %vm97 = vcmp.eq.s32.totalorder %v40, 1
    %v98 = vsel %vm97, 1, 0
    %v99 = vcvt.s32.f32 %v98
    %v100 = vmul.f32 %v99, -2.0
    %v101 = vadd.f32 %v96, %v100
    %v102 = vmul.f32 %v95, %v52
    %v103 = vadd.f32 %v86, %v102
    %v104 = vmul.f32 %v101, %v49
    %v105 = vadd.f32 %v103, %v104
    %106 = vst [vmem:[#allocation7] sm:$0x1] %v105
    // Predicated region
    $region18: #{tpu_custom_call.1} parent=1 // pred_check
      _
    $region19: #{tpu_custom_call.1} parent=1 // pred_check_branch
      %108 = sbr.rel (0) target = $region21
    $region20: #{tpu_custom_call.1} parent=1 // pred_region
      %s110 = ssub.s32 16, 16
      %111 = vsyncadd [#allocation4], %s110
      %s113 = sshll.u32 [#allocation7], 4
      %s114 = int_to_ptr.vmem [resolvable:$true] %s113
      %116 = dma.vmem_to_hbm [thread:$0]  %s114, 16, %s2, [#allocation4]
    $region21: #{tpu_custom_call.1} parent=1 // pred_fallthru
      _
    // Predicated region
    $region22: #{tpu_custom_call.1} parent=1 // pred_check
      _
    $region23: #{tpu_custom_call.1} parent=1 // pred_check_branch
      %118 = sbr.rel (0) target = $region25
    $region24: #{tpu_custom_call.1} parent=1 // pred_region
      %119 = dma.done [#allocation4], 16
    $region25: #{tpu_custom_call.1} parent=1 // pred_fallthru
      _
    %120 = vsyncpa [#allocation3], 1
    %121 = vsyncpa [#allocation6], 1
    %122 = vsyncpa [#allocation4], 1

</llo_original>
